<compile_context>
chip_gen: v6e
topology: v6e:2x2x1
jax: 0.10.0
libtpu: 0.0.40
codegen_flags: <defaults>
</compile_context>

<pallas_src>
import jax
import jax.numpy as jnp
from jax.experimental import pallas as pl
from jax.experimental.pallas import tpu as pltpu

LN_EPS = 1e-5  # PyTorch nn.LayerNorm default


def _round_up(n, m):
    return ((n + m - 1) // m) * m


# --------------------- fused LayerNorm + Linear kernel ----------------------
def _prenorm_linear_kernel(x_ref, w_ref, b_ref, o_ref):
    # x_ref: (tm, D); w_ref: (D, Dout) = gamma-folded weight;
    # b_ref: (1, Dout) = beta-folded bias; o_ref: (tm, Dout)
    x = x_ref[...].astype(jnp.float32)
    d_inv = 1.0 / x.shape[-1]
    s1 = jnp.sum(x, axis=-1, keepdims=True)
    s2 = jnp.sum(x * x, axis=-1, keepdims=True)
    mean = s1 * d_inv
    var = s2 * d_inv - mean * mean            # biased variance, like torch
    inv = jax.lax.rsqrt(var + LN_EPS)
    xhat = (x - mean) * inv                   # affine folded into w/b
    acc = jnp.dot(xhat.astype(w_ref.dtype), w_ref[...],
                  preferred_element_type=jnp.float32)
    o_ref[...] = (acc + b_ref[...].astype(jnp.float32)).astype(o_ref.dtype)


def prenorm_linear(x, gamma, beta, w, b, *, block_rows=None):
    """Fused fn(LayerNorm(x)) with fn = Linear(w, b).

    x: (B, N, D); gamma/beta: (D,); w: (D, Dout); b: (Dout,).
    Returns (B, N, Dout).
    """
    B, N, D = x.shape
    Dout = w.shape[1]
    R = B * N
    x2d = x.reshape(R, D)

    # Fold the LN affine into the linear layer (one-time O(D*Dout) precompute):
    #   (xhat*gamma + beta) @ W + b == xhat @ (gamma[:,None]*W) + (beta@W + b)
    w_f = (gamma.astype(jnp.float32)[:, None] * w.astype(jnp.float32)).astype(w.dtype)
    b_f = (beta.astype(jnp.float32) @ w.astype(jnp.float32)
           + b.astype(jnp.float32)).reshape(1, Dout)

    # Row tile: big for throughput (grid-step overhead ~0.35us), clamped for
    # tiny inputs, multiple of 8 (sublane).
    if block_rows is None:
        block_rows = 1024 if max(D, Dout) <= 512 else 256
    tm = min(block_rows, _round_up(R, 8))
    # Guarantee >= 2 grid steps along the "parallel" row axis so both v7x
    # TensorCores get work when everything fits in one tile.
    if pl.cdiv(R, tm) == 1 and tm > 8:
        tm = _round_up(pl.cdiv(R, 2), 8)
    grid = (pl.cdiv(R, tm),)   # partial last block handled by Pallas

    itemsize = jnp.dtype(x.dtype).itemsize
    w_itemsize = jnp.dtype(w.dtype).itemsize
    flops = 2 * R * D * Dout
    bytes_accessed = ((R * D + R * Dout) * itemsize
                      + D * Dout * w_itemsize + Dout * 4)

    # Explicit VMEM budget: double-buffered x/out tiles + single-buffered
    # weight/bias, with headroom; stay well below v7x's 64 MiB physical VMEM.
    vmem_bytes = (2 * tm * (D + Dout) * itemsize
                  + (D * Dout) * w_itemsize + Dout * 4)
    vmem_limit = min(max(2 * vmem_bytes, 16 << 20), 64 << 20)

    out2d = pl.pallas_call(
        _prenorm_linear_kernel,
        out_shape=jax.ShapeDtypeStruct((R, Dout), x.dtype),
        grid_spec=pltpu.PrefetchScalarGridSpec(
            num_scalar_prefetch=0,
            grid=grid,
            in_specs=[
                pl.BlockSpec((tm, D), lambda i: (i, 0)),          # x row-tile
                pl.BlockSpec((D, Dout), lambda i: (0, 0),         # folded weight
                             pipeline_mode=pl.Buffered(1)),
                pl.BlockSpec((1, Dout), lambda i: (0, 0),         # folded bias
                             pipeline_mode=pl.Buffered(1)),
            ],
            out_specs=pl.BlockSpec((tm, Dout), lambda i: (i, 0)),
        ),
        compiler_params=pltpu.CompilerParams(
            dimension_semantics=("parallel",),
            vmem_limit_bytes=vmem_limit),
        cost_estimate=pl.CostEstimate(
            flops=flops, transcendentals=R, bytes_accessed=bytes_accessed),
    )(x2d, w_f, b_f)

    return out2d.reshape(B, N, Dout)


if __name__ == "__main__":
    # Small but lane-dense shapes: batch=2, seq=8, hidden=128 (multiple of 128).
    B, N, D = 2, 8, 128

    key = jax.random.PRNGKey(0)
    kx, kg, kbn, kw, kb = jax.random.split(key, 5)

    x = jax.random.normal(kx, (B, N, D), dtype=jnp.float32)

    # LayerNorm params (non-trivial to exercise the affine path).
    gamma = 1.0 + 0.1 * jax.random.normal(kg, (D,), dtype=jnp.float32)
    beta = 0.1 * jax.random.normal(kbn, (D,), dtype=jnp.float32)

    # fn = Linear(D, D), deterministic init.
    w = jax.random.normal(kw, (D, D), dtype=jnp.float32) * 0.02
    b_lin = jax.random.normal(kb, (D,), dtype=jnp.float32) * 0.02

    out = prenorm_linear(x, gamma, beta, w, b_lin)
    jax.block_until_ready(out)

    # Pure-JAX reference check: fn(LayerNorm(x)).
    mean = jnp.mean(x, axis=-1, keepdims=True)
    var = jnp.mean((x - mean) ** 2, axis=-1, keepdims=True)
    ref_norm = (x - mean) * jax.lax.rsqrt(var + LN_EPS) * gamma + beta
    ref = jnp.einsum("bnd,de->bne", ref_norm, w) + b_lin

    assert out.shape == (B, N, D)
    assert jnp.allclose(out, ref, atol=1e-3, rtol=1e-3), "mismatch vs reference"

    print("KERNEL_OK")
</pallas_src>

<mosaic_0001>
module attributes {stable_mosaic.version = 11 : i64} {
  func.func @_prenorm_linear_kernel(%arg0: i32, %arg1: memref<8x128xf32, #tpu.memory_space<vmem>>, %arg2: memref<128x128xf32, #tpu.memory_space<vmem>>, %arg3: memref<1x128xf32, #tpu.memory_space<vmem>>, %arg4: memref<8x128xf32, #tpu.memory_space<vmem>>) attributes {dimension_semantics = [#tpu.dimension_semantics<parallel>], iteration_bounds = array<i64: 2>, scalar_prefetch = 0 : i64, scratch_operands = 0 : i64, tpu.core_type = #tpu.core_type<tc>, window_params = [{transform_indices = @transform_0, window_bounds = array<i64: 8, 128>}, {pipeline_mode = #tpu.pipeline_mode<synchronous>, transform_indices = @transform_1, window_bounds = array<i64: 128, 128>}, {pipeline_mode = #tpu.pipeline_mode<synchronous>, transform_indices = @transform_2, window_bounds = array<i64: 1, 128>}, {transform_indices = @transform_3, window_bounds = array<i64: 8, 128>}]} {
    %c0 = arith.constant 0 : index
    %c0_0 = arith.constant 0 : index
    %0 = vector.load %arg1[%c0, %c0_0] : memref<8x128xf32, #tpu.memory_space<vmem>>, vector<8x128xf32>
    %cst = arith.constant dense<0.000000e+00> : vector<8xf32>
    %1 = vector.multi_reduction <add>, %0, %cst [1] : vector<8x128xf32> to vector<8xf32>
    %2 = vector.shape_cast %1 : vector<8xf32> to vector<8x1xf32>
    %3 = arith.mulf %0, %0 : vector<8x128xf32>
    %cst_1 = arith.constant dense<0.000000e+00> : vector<8xf32>
    %4 = vector.multi_reduction <add>, %3, %cst_1 [1] : vector<8x128xf32> to vector<8xf32>
    %5 = vector.shape_cast %4 : vector<8xf32> to vector<8x1xf32>
    %cst_2 = arith.constant 7.812500e-03 : f32
    %6 = vector.broadcast %cst_2 : f32 to vector<8x1xf32>
    %7 = arith.mulf %2, %6 : vector<8x1xf32>
    %cst_3 = arith.constant 7.812500e-03 : f32
    %8 = vector.broadcast %cst_3 : f32 to vector<8x1xf32>
    %9 = arith.mulf %5, %8 : vector<8x1xf32>
    %10 = arith.mulf %7, %7 : vector<8x1xf32>
    %11 = arith.subf %9, %10 : vector<8x1xf32>
    %cst_4 = arith.constant 9.99999974E-6 : f32
    %12 = vector.broadcast %cst_4 : f32 to vector<8x1xf32>
    %13 = arith.addf %11, %12 : vector<8x1xf32>
    %14 = math.rsqrt %13 : vector<8x1xf32>
    %15 = vector.broadcast %7 : vector<8x1xf32> to vector<8x128xf32>
    %16 = arith.subf %0, %15 : vector<8x128xf32>
    %17 = vector.broadcast %14 : vector<8x1xf32> to vector<8x128xf32>
    %18 = arith.mulf %16, %17 : vector<8x128xf32>
    %c0_5 = arith.constant 0 : index
    %c0_6 = arith.constant 0 : index
    %19 = vector.load %arg2[%c0_5, %c0_6] : memref<128x128xf32, #tpu.memory_space<vmem>>, vector<128x128xf32>
    %cst_7 = arith.constant dense<0.000000e+00> : vector<8x128xf32>
    %20 = tpu.matmul %18, %19, %cst_7 {dimension_numbers = #tpu.dot_dimension_numbers<[1], [0], [0], [1], [0, 0, 1, 1], [], []>} : vector<8x128xf32>, vector<128x128xf32>, vector<8x128xf32> -> vector<8x128xf32>
    %c0_8 = arith.constant 0 : index
    %c0_9 = arith.constant 0 : index
    %21 = vector.load %arg3[%c0_8, %c0_9] : memref<1x128xf32, #tpu.memory_space<vmem>>, vector<1x128xf32>
    %22 = vector.broadcast %21 : vector<1x128xf32> to vector<8x128xf32>
    %23 = arith.addf %20, %22 : vector<8x128xf32>
    %c0_10 = arith.constant 0 : index
    %c0_11 = arith.constant 0 : index
    %24 = vector.load %arg4[%c0_10, %c0_11] : memref<8x128xf32, #tpu.memory_space<vmem>>, vector<8x128xf32>
    tpu.vector_store %arg4[%c0_10, %c0_11], %23 {strides = array<i32>} : memref<8x128xf32, #tpu.memory_space<vmem>>, vector<8x128xf32>,
    return
  }
  func.func @transform_0(%arg0: i32) -> (i32, i32) {
    %c0_i32 = arith.constant 0 : i32
    %c0_i32_0 = arith.constant 0 : i32
    return %arg0, %c0_i32 : i32, i32
  }
  func.func @transform_1(%arg0: i32) -> (i32, i32) {
    %c0_i32 = arith.constant 0 : i32
    %c0_i32_0 = arith.constant 0 : i32
    %c0_i32_1 = arith.constant 0 : i32
    return %c0_i32, %c0_i32_0 : i32, i32
  }
  func.func @transform_2(%arg0: i32) -> (i32, i32) {
    %c0_i32 = arith.constant 0 : i32
    %c0_i32_0 = arith.constant 0 : i32
    %c0_i32_1 = arith.constant 0 : i32
    return %c0_i32, %c0_i32_0 : i32, i32
  }
  func.func @transform_3(%arg0: i32) -> (i32, i32) {
    %c0_i32 = arith.constant 0 : i32
    %c0_i32_0 = arith.constant 0 : i32
    return %arg0, %c0_i32 : i32, i32
  }
}

</mosaic_0001>

<llo_original>
// kernel: tpu_custom_call.1
$region0: #{tpu_custom_call.1}
  #allocation0 [shape = 'u32[]', space=smem, size = 0x4, offset = 0x4, fixed_abs, tag = 'smem constant byte address 0x4 - core index']
  #allocation1 [shape = 'u32[144,128]{1,0:T(1,128)}', space=vmem, size = 0x12000, scoped, tag = 'internal scratch']
  %s0 = inlined_call_operand.hbm [shape: f32[16,128], index: 0, kind: input, shape index: {}]
  %s1 = inlined_call_operand.hbm [shape: f32[128,128], index: 1, kind: input, shape index: {}]
  %s2 = inlined_call_operand.vmem [shape: f32[1,128], index: 2, kind: input, shape index: {}]
  %s3 = inlined_call_operand.hbm [shape: f32[16,128], index: 3, kind: output, shape index: {}]
  %s4 = sld [smem:[#allocation0]]
  $region53: #{tpu_custom_call.1} parent=0
    _
  %s6 = ssub.s32 1, %s4
  %s7 = scalar_select 0, %s6, %s4
  $region1: #{tpu_custom_call.1} parent=0
    #allocation2 [shape = 'u8[8192]{0}', space=vmem, size = 0x2000, scoped, tag = 'input window, operand 0']
    #allocation3 [shape = 's32[2]{0}', space=sflag, size = 0x8, scoped, tag = 'scoped memory for tpu_custom_call.1']
    #allocation4 [shape = 's32[2]{0}', space=sflag, size = 0x8, scoped, tag = 'scoped memory for tpu_custom_call.1']
    #allocation5 [shape = 'u8[65536]{0}', space=vmem, size = 0x10000, scoped, tag = 'input window, operand 1, single buffered']
    #allocation6 [shape = 's32[1]{0}', space=sflag, size = 0x4, scoped, tag = 'scoped memory for tpu_custom_call.1']
    #allocation7 [shape = 'u8[8192]{0}', space=vmem, size = 0x2000, scoped, tag = 'output window, operand 0']
    %8 = vsyncpa [#allocation3], 0
    %s9 = scalar_lea.sflag [#allocation3], 1
    %10 = vsyncpa %s9, 0
    %11 = vsyncpa [#allocation6], 0
    %12 = vsyncpa [#allocation4], 0
    %s13 = scalar_lea.sflag [#allocation4], 1
    %14 = vsyncpa %s13, 0
    loop: start=0, step=1, limit=4
    $region2: #{tpu_custom_call.1} parent=1 // loop_pre_header
      _
    $region3: #{tpu_custom_call.1} parent=1 // loop_header
      %s16 = sphi 0, %s20
      %p17 = scmp.ge.s32.totalorder %s16, 4
      %s26 = sphi 0, %s28
      %s29 = sphi 0, %s26
      %s30 = sphi 0, %s29
      %s46 = sphi 0, %s30
      %s50 = sphi 0, %s50
      %s52 = sphi 0, %s50
      %s53 = sphi 0, %s52
      %s67 = sphi 0, %s53
      %s71 = sphi 0, %s71
      %s73 = sphi 0, %s71
      %s74 = sphi 0, %s73
      %s88 = sphi 0, %s74
      %s94 = sphi 0, %s96
      %s97 = sphi 0, %s94
      %s98 = sphi 0, %s97
      %s114 = sphi 0, %s98
    $region4: #{tpu_custom_call.1} parent=1 // loop_header_branch
      %19 = sbr.rel (%p17) target = $region8
    $region5: #{tpu_custom_call.1} parent=1 // loop_body
      %s21 = ssub.s32 %s16, 1
      %s22 = ssub.s32 %s16, 2
      %s23 = sadd.s32 %s16, 1
      %s24 = ssub.s32 %s16, %s23
      %p25 = scmp.eq.s32.totalorder %s24, 0
      %s27 = sadd.s32 %s26, 1
      %s28 = scalar_select %p25, %s26, %s27
      %p31 = pneg %p25
      %p32 = scmp.eq.s32.totalorder %s16, 1
      %p33 = por %p31, %p32
      %p34 = scmp.ne.s32.totalorder %s26, %s29
      %p35 = scmp.eq.s32.totalorder %s16, 0
      %p36 = por %p34, %p35
      %p37 = scmp.ne.s32.totalorder %s26, %s29
      %p38 = scmp.eq.s32.totalorder %s21, 1
      %p39 = por %p37, %p38
      %p40 = scmp.ne.s32.totalorder %s29, %s30
      %p41 = scmp.eq.s32.totalorder %s21, 0
      %p42 = por %p40, %p41
      %p43 = scmp.ne.s32.totalorder %s29, %s30
      %p44 = scmp.eq.s32.totalorder %s22, 1
      %p45 = por %p43, %p44
      %p47 = scmp.ne.s32.totalorder %s30, %s46
      %p48 = scmp.eq.s32.totalorder %s22, 0
      %p49 = por %p47, %p48
      %s51 = sadd.s32 %s50, 1
      %p54 = scmp.eq.s32.totalorder %s16, 1
      %p55 = scmp.ne.s32.totalorder %s50, %s52
      %p56 = scmp.eq.s32.totalorder %s16, 0
      %p57 = por %p55, %p56
      %p58 = scmp.ne.s32.totalorder %s50, %s52
      %p59 = scmp.eq.s32.totalorder %s21, 1
      %p60 = por %p58, %p59
      %p61 = scmp.ne.s32.totalorder %s52, %s53
      %p62 = scmp.eq.s32.totalorder %s21, 0
      %p63 = por %p61, %p62
      %p64 = scmp.ne.s32.totalorder %s52, %s53
      %p65 = scmp.eq.s32.totalorder %s22, 1
      %p66 = por %p64, %p65
      %p68 = scmp.ne.s32.totalorder %s53, %s67
      %p69 = scmp.eq.s32.totalorder %s22, 0
      %p70 = por %p68, %p69
      %s72 = sadd.s32 %s71, 1
      %p75 = scmp.eq.s32.totalorder %s16, 1
      %p76 = scmp.ne.s32.totalorder %s71, %s73
      %p77 = scmp.eq.s32.totalorder %s16, 0
      %p78 = por %p76, %p77
      %p79 = scmp.ne.s32.totalorder %s71, %s73
      %p80 = scmp.eq.s32.totalorder %s21, 1
      %p81 = por %p79, %p80
      %p82 = scmp.ne.s32.totalorder %s73, %s74
      %p83 = scmp.eq.s32.totalorder %s21, 0
      %p84 = por %p82, %p83
      %p85 = scmp.ne.s32.totalorder %s73, %s74
      %p86 = scmp.eq.s32.totalorder %s22, 1
      %p87 = por %p85, %p86
      %p89 = scmp.ne.s32.totalorder %s74, %s88
      %p90 = scmp.eq.s32.totalorder %s22, 0
      %p91 = por %p89, %p90
      %s92 = ssub.s32 %s16, %s23
      %p93 = scmp.eq.s32.totalorder %s92, 0
      %s95 = sadd.s32 %s94, 1
      %s96 = scalar_select %p93, %s94, %s95
      %p99 = pneg %p93
      %p100 = scmp.eq.s32.totalorder %s16, 1
      %p101 = por %p99, %p100
      %p102 = scmp.ne.s32.totalorder %s94, %s97
      %p103 = scmp.eq.s32.totalorder %s16, 0
      %p104 = por %p102, %p103
      %p105 = scmp.ne.s32.totalorder %s94, %s97
      %p106 = scmp.eq.s32.totalorder %s21, 1
      %p107 = por %p105, %p106
      %p108 = scmp.ne.s32.totalorder %s97, %s98
      %p109 = scmp.eq.s32.totalorder %s21, 0
      %p110 = por %p108, %p109
      %p111 = scmp.ne.s32.totalorder %s97, %s98
      %p112 = scmp.eq.s32.totalorder %s22, 1
      %p113 = por %p111, %p112
      %p115 = scmp.ne.s32.totalorder %s98, %s114
      %p116 = scmp.eq.s32.totalorder %s22, 0
      %p117 = por %p115, %p116
      %p118 = scmp.le.s32.totalorder 1, %s16
      %p119 = scmp.lt.s32.totalorder %s16, 3
      %p120 = pnand %p118, %p119
      %p121 = pneg %p120
      // Predicated region
      $region9: #{tpu_custom_call.1} parent=5 // pred_check
        _
      $region10: #{tpu_custom_call.1} parent=5 // pred_check_branch
        %123 = sbr.rel (%p120) target = $region12
      $region11: #{tpu_custom_call.1} parent=5 // pred_region
        %s124 = ssub.s32 %s16, 1
        // Predicated region
        $region13: #{tpu_custom_call.1} parent=11 // pred_check
          %p125 = pneg %p63
        $region14: #{tpu_custom_call.1} parent=11 // pred_check_branch
          %127 = sbr.rel (%p125) target = $region16
        $region15: #{tpu_custom_call.1} parent=11 // pred_region
          %s129 = ssub.s32 2048, 2048
          %130 = vsyncadd [#allocation6], %s129
          %s131 = sshll.u32 [#allocation5], 4
          %s132 = int_to_ptr.vmem [resolvable:$true] %s131
          %137 = dma.hbm_to_vmem [thread:$0]  %s1, 2048, %s132, [#allocation6], 128, 128, 8
        $region16: #{tpu_custom_call.1} parent=11 // pred_fallthru
          _
        // Predicated region
        $region17: #{tpu_custom_call.1} parent=11 // pred_check
          %p138 = pneg %p84
        $region18: #{tpu_custom_call.1} parent=11 // pred_check_branch
          %140 = sbr.rel (%p138) target = $region20
        $region19: #{tpu_custom_call.1} parent=11 // pred_region
          _
        $region20: #{tpu_custom_call.1} parent=11 // pred_fallthru
          _
      $region12: #{tpu_custom_call.1} parent=5 // pred_fallthru
        _
      %p141 = scmp.lt.s32.totalorder %s16, 2
      // Predicated region
      $region21: #{tpu_custom_call.1} parent=5 // pred_check
        %p142 = pneg %p141
      $region22: #{tpu_custom_call.1} parent=5 // pred_check_branch
        %144 = sbr.rel (%p142) target = $region24
      $region23: #{tpu_custom_call.1} parent=5 // pred_region
        // Predicated region
        $region25: #{tpu_custom_call.1} parent=23 // pred_check
          %p145 = pneg %p36
        $region26: #{tpu_custom_call.1} parent=23 // pred_check_branch
          %147 = sbr.rel (%p145) target = $region28
        $region27: #{tpu_custom_call.1} parent=23 // pred_region
          %s148 = sand.u32 %s26, 1
          %s149 = scalar_lea.sflag [#allocation3], %s148
          %s150 = sand.u32 %s26, 1
          %s151 = smul.addr %s150, 8
          %s152 = scalar_lea.vmem [#allocation2], %s151
          %s154 = ssub.s32 128, 128
          %155 = vsyncadd %s149, %s154
          %s156 = smul.addr %s16, 128
          %s157 = scalar_lea.hbm %s0, %s156
          %s159 = sshll.u32 %s152, 4
          %s160 = int_to_ptr.vmem [resolvable:$true] %s159
          %162 = dma.hbm_to_vmem [thread:$0]  %s157, 128, %s160, %s149
        $region28: #{tpu_custom_call.1} parent=23 // pred_fallthru
          _
      $region24: #{tpu_custom_call.1} parent=5 // pred_fallthru
        _
      %p163 = scmp.le.s32.totalorder 1, %s16
      %p164 = scmp.lt.s32.totalorder %s16, 3
      %p165 = pnand %p163, %p164
      %p166 = pneg %p165
      // Predicated region
      $region29: #{tpu_custom_call.1} parent=5 // pred_check
        _
      $region30: #{tpu_custom_call.1} parent=5 // pred_check_branch
        %168 = sbr.rel (%p165) target = $region32
      $region31: #{tpu_custom_call.1} parent=5 // pred_region
        %s169 = ssub.s32 %s16, 1
        %s170 = sand.u32 %s29, 1
        %s171 = scalar_lea.sflag [#allocation3], %s170
        %s172 = sand.u32 %s29, 1
        %s173 = smul.addr %s172, 8
        %s174 = scalar_lea.vmem [#allocation2], %s173
        // Predicated region
        $region33: #{tpu_custom_call.1} parent=31 // pred_check
          %p175 = pneg %p42
        $region34: #{tpu_custom_call.1} parent=31 // pred_check_branch
          %177 = sbr.rel (%p175) target = $region36
        $region35: #{tpu_custom_call.1} parent=31 // pred_region
          %178 = dma.done %s171, 128
        $region36: #{tpu_custom_call.1} parent=31 // pred_fallthru
          _
        // Predicated region
        $region37: #{tpu_custom_call.1} parent=31 // pred_check
          %p179 = pneg %p63
        $region38: #{tpu_custom_call.1} parent=31 // pred_check_branch
          %181 = sbr.rel (%p179) target = $region40
        $region39: #{tpu_custom_call.1} parent=31 // pred_region
          %182 = dma.done [#allocation6], 2048
        $region40: #{tpu_custom_call.1} parent=31 // pred_fallthru
          _
        %s183 = sand.u32 %s29, 1
        %s184 = scalar_lea.sflag [#allocation3], %s183
        %s185 = sand.u32 %s29, 1
        %s186 = smul.addr %s185, 8
        %s187 = scalar_lea.vmem [#allocation2], %s186
        %p188 = pneg %p42
        %p189 = pneg %p39
        %p190 = pneg %p63
        %p191 = pneg %p60
        %p192 = pneg %p84
        %p193 = pneg %p81
        %p194 = pneg %p110
        %p195 = pneg %p107
        %s196 = sand.u32 %s97, 1
        %s197 = scalar_lea.sflag [#allocation4], %s196
        %s198 = sand.u32 %s97, 1
        %s199 = smul.addr %s198, 8
        %s200 = scalar_lea.vmem [#allocation7], %s199
        %v201 = vld [vmem:[%s174] sm:$0xff]
        %202 = vadd.xlane.f32.xlu0 %v201
        %v203 = vpop.xlane.xlu0 %202
        %v204 = vmul.f32 %v201, %v201
        %205 = vadd.xlane.f32.xlu0 %v204
        %v206 = vpop.xlane.xlu0 %205
        %v207 = vmul.f32 %v203, 0.0078125
        %v208 = vmul.f32 %v206, 0.0078125
        %v209 = vmul.f32 %v207, %v207
        %v210 = vsub.f32 %v208, %v209
        %v211 = vadd.f32 %v210, 1e-05
        %v212 = vrsqrt.pop %v211
        %v213 = vsub.f32 %v201, %v207
        %v214 = vmul.f32 %v213, %v212
        %v215 = vld [vmem:[#allocation5] sm:$0xff]
        %v216 = vld [vmem:[#allocation5 + $0x8] sm:$0xff]
        %v217 = vld [vmem:[#allocation5 + $0x10] sm:$0xff]
        %v218 = vld [vmem:[#allocation5 + $0x18] sm:$0xff]
        %v219 = vld [vmem:[#allocation5 + $0x20] sm:$0xff]
        %v220 = vld [vmem:[#allocation5 + $0x28] sm:$0xff]
        %v221 = vld [vmem:[#allocation5 + $0x30] sm:$0xff]
        %v222 = vld [vmem:[#allocation5 + $0x38] sm:$0xff]
        %v223 = vld [vmem:[#allocation5 + $0x40] sm:$0xff]
        %v224 = vld [vmem:[#allocation5 + $0x48] sm:$0xff]
        %v225 = vld [vmem:[#allocation5 + $0x50] sm:$0xff]
        %v226 = vld [vmem:[#allocation5 + $0x58] sm:$0xff]
        %v227 = vld [vmem:[#allocation5 + $0x60] sm:$0xff]
        %v228 = vld [vmem:[#allocation5 + $0x68] sm:$0xff]
        %v229 = vld [vmem:[#allocation5 + $0x70] sm:$0xff]
        %v230 = vld [vmem:[#allocation5 + $0x78] sm:$0xff]
        %v231 = vld [vmem:[%s2] sm:$0x1]
        %v233 = vlaneseq
        %v234 = vshrl.u32 %v233, 7
        %v235 = vsub.s32 0, %v234
        %v236 = vrot.slane %v231, %v235
        %238 = vmatprep.subr.mxu0 0.0
        %239 = vmatpush1.msra.mxu0 %v230
        %240 = vmatprep.subr.mxu0 0.0
        %241 = vmatpush1.msra.mxu0 %v229
        %242 = vmatprep.subr.mxu0 0.0
        %243 = vmatpush1.msra.mxu0 %v228
        %244 = vmatprep.subr.mxu0 0.0
        %245 = vmatpush1.msra.mxu0 %v227
        %246 = vmatprep.subr.mxu0 0.0
        %247 = vmatpush1.msra.mxu0 %v226
        %248 = vmatprep.subr.mxu0 0.0
        %249 = vmatpush1.msra.mxu0 %v225
        %250 = vmatprep.subr.mxu0 0.0
        %251 = vmatpush1.msra.mxu0 %v224
        %252 = vmatprep.subr.mxu0 0.0
        %253 = vmatpush1.msra.mxu0 %v223
        %254 = vmatprep.subr.mxu0 0.0
        %255 = vmatpush1.msra.mxu0 %v222
        %256 = vmatprep.subr.mxu0 0.0
        %257 = vmatpush1.msra.mxu0 %v221
        %258 = vmatprep.subr.mxu0 0.0
        %259 = vmatpush1.msra.mxu0 %v220
        %260 = vmatprep.subr.mxu0 0.0
        %261 = vmatpush1.msra.mxu0 %v219
        %262 = vmatprep.subr.mxu0 0.0
        %263 = vmatpush1.msra.mxu0 %v218
        %264 = vmatprep.subr.mxu0 0.0
        %265 = vmatpush1.msra.mxu0 %v217
        %266 = vmatprep.subr.mxu0 0.0
        %267 = vmatpush1.msra.mxu0 %v216
        %268 = vmatprep.subr.mxu0 0.0
        %269 = vmatpush1.msra.mxu0 %v215
        %270 = vmatprep.subr.mxu0 0.0
        %271 = vmatpush2.msra.mxu0 0.0
        %272 = vmatprep.subr.mxu0 0.0
        %273 = vmatpush2.msra.mxu0 0.0
        %274 = vmatprep.subr.mxu0 0.0
        %275 = vmatpush2.msra.mxu0 0.0
        %276 = vmatprep.subr.mxu0 0.0
        %277 = vmatpush2.msra.mxu0 0.0
        %278 = vmatprep.subr.mxu0 0.0
        %279 = vmatpush2.msra.mxu0 0.0
        %280 = vmatprep.subr.mxu0 0.0
        %281 = vmatpush2.msra.mxu0 0.0
        %282 = vmatprep.subr.mxu0 0.0
        %283 = vmatpush2.msra.mxu0 0.0
        %284 = vmatprep.subr.mxu0 0.0
        %285 = vmatpush2.msra.mxu0 0.0
        %286 = vmatprep.subr.mxu0 0.0
        %287 = vmatpush2.msra.mxu0 0.0
        %288 = vmatprep.subr.mxu0 0.0
        %289 = vmatpush2.msra.mxu0 0.0
        %290 = vmatprep.subr.mxu0 0.0
        %291 = vmatpush2.msra.mxu0 0.0
        %292 = vmatprep.subr.mxu0 0.0
        %293 = vmatpush2.msra.mxu0 0.0
        %294 = vmatprep.subr.mxu0 0.0
        %295 = vmatpush2.msra.mxu0 0.0
        %296 = vmatprep.subr.mxu0 0.0
        %297 = vmatpush2.msra.mxu0 0.0
        %298 = vmatprep.subr.mxu0 0.0
        %299 = vmatpush2.msra.mxu0 0.0
        %300 = vmatprep.subr.mxu0 0.0
        %301 = vmatpush2.msra.mxu0 0.0
        %302 = vmatprep.mubr.f32.mxu0 0.0
        %303 = vmatmul.mubr.f32.gmra.mxu0 %v214
        %v304 = vpop.f32.mrf.mxu0
        %v305 = vadd.f32 %v236, %v304
        %v306 = vpop.f32.mrf.mxu0
        %307 = vdwg.mxu0
        %308 = vst [vmem:[%s200] sm:$0xff] %v305
        %s309 = sand.u32 %s97, 1
        %s310 = scalar_lea.sflag [#allocation4], %s309
        %s311 = sand.u32 %s97, 1
        %s312 = smul.addr %s311, 8
        %s313 = scalar_lea.vmem [#allocation7], %s312
        // Predicated region
        $region41: #{tpu_custom_call.1} parent=31 // pred_check
          %p314 = pneg %p107
        $region42: #{tpu_custom_call.1} parent=31 // pred_check_branch
          %316 = sbr.rel (%p314) target = $region44
        $region43: #{tpu_custom_call.1} parent=31 // pred_region
          %s318 = ssub.s32 128, 128
          %319 = vsyncadd %s310, %s318
          %s320 = smul.addr %s21, 128
          %s321 = scalar_lea.hbm %s3, %s320
          %s323 = sshll.u32 %s313, 4
          %s324 = int_to_ptr.vmem [resolvable:$true] %s323
          %326 = dma.vmem_to_hbm [thread:$0]  %s324, 128, %s321, %s310
        $region44: #{tpu_custom_call.1} parent=31 // pred_fallthru
          _
      $region32: #{tpu_custom_call.1} parent=5 // pred_fallthru
        _
      %p327 = scmp.le.s32.totalorder 2, %s16
      // Predicated region
      $region45: #{tpu_custom_call.1} parent=5 // pred_check
        %p328 = pneg %p327
      $region46: #{tpu_custom_call.1} parent=5 // pred_check_branch
        %330 = sbr.rel (%p328) target = $region48
      $region47: #{tpu_custom_call.1} parent=5 // pred_region
        %s331 = ssub.s32 %s16, 2
        // Predicated region
        $region49: #{tpu_custom_call.1} parent=47 // pred_check
          %p332 = pneg %p113
        $region50: #{tpu_custom_call.1} parent=47 // pred_check_branch
          %334 = sbr.rel (%p332) target = $region52
        $region51: #{tpu_custom_call.1} parent=47 // pred_region
          %s335 = sand.u32 %s98, 1
          %s336 = scalar_lea.sflag [#allocation4], %s335
          %s337 = sand.u32 %s98, 1
          %s338 = smul.addr %s337, 8
          %s339 = scalar_lea.vmem [#allocation7], %s338
          %340 = dma.done %s336, 128
        $region52: #{tpu_custom_call.1} parent=47 // pred_fallthru
          _
      $region48: #{tpu_custom_call.1} parent=5 // pred_fallthru
        _
    $region6: #{tpu_custom_call.1} parent=1 // loop_footer
      %s20 = sadd.s32 1, %s16
    $region7: #{tpu_custom_call.1} parent=1 // loop_footer_branch
      %15 = sbr.rel target = $region3
    $region8: #{tpu_custom_call.1} parent=1 // loop_exit
      _
    %341 = vsyncpa [#allocation3], 1
    %s342 = scalar_lea.sflag [#allocation3], 1
    %343 = vsyncpa %s342, 1
    %344 = vsyncpa [#allocation6], 1
    %345 = vsyncpa [#allocation4], 1
    %s346 = scalar_lea.sflag [#allocation4], 1
    %347 = vsyncpa %s346, 1

</llo_original>
